<compile_context>
chip_gen: v5e
topology: v5e:2x2
jax: 0.10.0
libtpu: 0.0.40
codegen_flags: <defaults>
</compile_context>

<pallas_src>
import jax
import jax.numpy as jnp
from jax.experimental import pallas as pl
from jax.experimental.pallas import tpu as pltpu


def _round_up(x: int, m: int) -> int:
    return ((x + m - 1) // m) * m


def soft_q_kernel(s_ref, a_ref, w1s_ref, w1a_ref, b1_ref, w2_ref, b2_ref,
                  w3_ref, b3_ref, o_ref):
    # Layer 1: h1 = relu(state @ W1_s + action @ W1_a + b1)  (concat-free).
    s = s_ref[...].astype(jnp.bfloat16)
    a = a_ref[...].astype(jnp.bfloat16)
    h1 = jnp.dot(s, w1s_ref[...], preferred_element_type=jnp.float32)
    h1 = h1 + jnp.dot(a, w1a_ref[...], preferred_element_type=jnp.float32)
    h1 = jnp.maximum(h1 + b1_ref[...], 0.0)

    # Layer 2: h2 = relu(h1 @ W2 + b2) -- bf16 MXU operands, f32 accumulation.
    h2 = jnp.dot(h1.astype(jnp.bfloat16), w2_ref[...],
                 preferred_element_type=jnp.float32)
    h2 = jnp.maximum(h2 + b2_ref[...], 0.0)

    # Layer 3: q = h2 @ w3 + b3, as a broadcast-multiply + lane reduction on the
    # (otherwise idle) VPU/XLU; b3 is read from SMEM.
    q = jnp.sum(h2 * w3_ref[...], axis=-1, keepdims=True) + b3_ref[0, 0]
    o_ref[...] = q.astype(o_ref.dtype)


def soft_q_forward(state, action, params, *, block_rows=512):
    """state: (B, num_inputs), action: (B, num_actions) -> (B, 1) float32."""
    w1, b1, w2, b2, w3, b3 = params
    B, num_inputs = state.shape
    num_actions = action.shape[1]
    hidden = w1.shape[1]
    assert w1.shape[0] == num_inputs + num_actions

    # --- pad hidden dim to full 128-lane vregs (exact: zero pads stay zero) ---
    H = _round_up(hidden, 128)
    dh = H - hidden
    w1p = jnp.pad(w1.astype(jnp.float32), ((0, 0), (0, dh)))
    w1s = w1p[:num_inputs].astype(jnp.bfloat16)                       # (F_s, H)
    w1a = w1p[num_inputs:].astype(jnp.bfloat16)                       # (F_a, H)
    b1p = jnp.pad(b1.astype(jnp.float32), ((0, 0), (0, dh)))          # (1, H)
    w2p = jnp.pad(w2.astype(jnp.float32), ((0, dh), (0, dh))).astype(jnp.bfloat16)
    b2p = jnp.pad(b2.astype(jnp.float32), ((0, 0), (0, dh)))          # (1, H)
    w3r = jnp.pad(w3.astype(jnp.float32), ((0, dh), (0, 0))).reshape(1, H)
    b3s = jnp.asarray(b3, jnp.float32).reshape(1, 1)                  # SMEM scalar

    # --- batch tiling: pad B to a lane-friendly multiple, pick a tile that
    # divides it (largest <= block_rows). ---
    B_pad = _round_up(B, 128)
    TB = 128
    for cand in (1024, 512, 256):
        if cand <= block_rows and B_pad % cand == 0:
            TB = cand
            break
    grid = (B_pad // TB,)
    pad_b = B_pad - B
    state_p = jnp.pad(state, ((0, pad_b), (0, 0)))
    action_p = jnp.pad(action, ((0, pad_b), (0, 0)))
    # NOTE: state/action keep their incoming dtype; the bf16 cast for the MXU is
    # done inside the kernel.  Feeding bf16 activations from the producer would
    # additionally halve the input HBM stream.

    f_total = num_inputs + num_actions
    flops = 2 * B_pad * (f_total * H + H * H + H)
    bytes_accessed = (
        B_pad * num_inputs * state_p.dtype.itemsize
        + B_pad * num_actions * action_p.dtype.itemsize
        + (f_total * H + H * H) * 2          # bf16 weights
        + (3 * H + 1) * 4                    # f32 biases + w3 row + b3
        + B_pad * 4)                         # q out
    cost = pl.CostEstimate(flops=flops, transcendentals=0,
                           bytes_accessed=bytes_accessed)

    in_specs = [
        # Batch-tiled activations (auto double-buffered by the pipeline).
        # If the x DMA is exposed on v5e/v6e, add pipeline_mode=pl.Buffered(3).
        pl.BlockSpec((TB, num_inputs), lambda i: (i, 0)),
        pl.BlockSpec((TB, num_actions), lambda i: (i, 0)),
        # Weights / biases: constant index_map -> fetched once, VMEM-resident.
        pl.BlockSpec((num_inputs, H), lambda i: (0, 0)),
        pl.BlockSpec((num_actions, H), lambda i: (0, 0)),
        pl.BlockSpec((1, H), lambda i: (0, 0)),
        pl.BlockSpec((H, H), lambda i: (0, 0)),
        pl.BlockSpec((1, H), lambda i: (0, 0)),
        pl.BlockSpec((1, H), lambda i: (0, 0)),
        # b3 scalar lives in SMEM (no padded VMEM tile / extra DMA descriptor).
        pl.BlockSpec(memory_space=pltpu.MemorySpace.SMEM),
    ]
    out_spec = pl.BlockSpec((TB, 1), lambda i: (i, 0))

    q_pad = pl.pallas_call(
        soft_q_kernel,
        out_shape=jax.ShapeDtypeStruct((B_pad, 1), jnp.float32),
        grid=grid,
        in_specs=in_specs,
        out_specs=out_spec,
        compiler_params=pltpu.CompilerParams(
            dimension_semantics=("parallel",)),
        cost_estimate=cost,
    )(state_p, action_p, w1s, w1a, b1p, w2p, b2p, w3r, b3s)
    return q_pad[:B]


def init_soft_q_params(key, num_inputs, num_actions, hidden_size, init_w=0.003):
    """Init mirroring the PyTorch module (weights pre-transposed to (in, out))."""
    k1w, k1b, k2w, k2b, k3w, k3b = jax.random.split(key, 6)
    in1 = num_inputs + num_actions

    def u(k, shape, bound):
        return jax.random.uniform(k, shape, jnp.float32, -bound, bound)

    bound1 = 1.0 / jnp.sqrt(jnp.float32(in1))
    bound2 = 1.0 / jnp.sqrt(jnp.float32(hidden_size))
    w1 = u(k1w, (in1, hidden_size), bound1)
    b1 = u(k1b, (1, hidden_size), bound1)
    w2 = u(k2w, (hidden_size, hidden_size), bound2)
    b2 = u(k2b, (1, hidden_size), bound2)
    w3 = u(k3w, (hidden_size, 1), init_w)
    b3 = u(k3b, (1, 1), init_w)
    return (w1, b1, w2, b2, w3, b3)


def soft_q_reference(state, action, params, matmul_dtype=jnp.float32):
    """Pure-JAX reference. matmul_dtype=bf16 mirrors the kernel's MXU path."""
    w1, b1, w2, b2, w3, b3 = params
    x = jnp.concatenate([state, action], axis=1)
    h1 = jax.nn.relu(jnp.dot(x.astype(matmul_dtype), w1.astype(matmul_dtype),
                             preferred_element_type=jnp.float32) + b1)
    h2 = jax.nn.relu(jnp.dot(h1.astype(matmul_dtype), w2.astype(matmul_dtype),
                             preferred_element_type=jnp.float32) + b2)
    return jnp.dot(h2, w3, preferred_element_type=jnp.float32) + b3


if __name__ == "__main__":
    num_inputs, num_actions, hidden_size = 8, 4, 32
    batch = 8

    key = jax.random.PRNGKey(0)
    k_params, k_state, k_action = jax.random.split(key, 3)

    params = init_soft_q_params(k_params, num_inputs, num_actions, hidden_size)
    state = jax.random.normal(k_state, (batch, num_inputs), jnp.float32)
    action = jax.random.normal(k_action, (batch, num_actions), jnp.float32)

    q = soft_q_forward(state, action, params)
    jax.block_until_ready(q)
    assert q.shape == (batch, 1), q.shape

    # Tight check against a reference that mirrors the kernel's bf16 MXU path.
    q_ref_bf16 = soft_q_reference(state, action, params, matmul_dtype=jnp.bfloat16)
    assert jnp.allclose(q, q_ref_bf16, atol=1e-3, rtol=0.0), (q, q_ref_bf16)
    # Looser check against the exact f32 semantics of the torch module.
    q_ref_f32 = soft_q_reference(state, action, params, matmul_dtype=jnp.float32)
    assert jnp.allclose(q, q_ref_f32, atol=5e-3, rtol=0.0), (q, q_ref_f32)

    print("KERNEL_OK")
</pallas_src>

<mosaic_0001>
module attributes {stable_mosaic.version = 11 : i64} {
  func.func @soft_q_kernel(%arg0: i32, %arg1: memref<128x8xf32, #tpu.memory_space<vmem>>, %arg2: memref<128x4xf32, #tpu.memory_space<vmem>>, %arg3: memref<8x128xbf16, #tpu.memory_space<vmem>>, %arg4: memref<4x128xbf16, #tpu.memory_space<vmem>>, %arg5: memref<1x128xf32, #tpu.memory_space<vmem>>, %arg6: memref<128x128xbf16, #tpu.memory_space<vmem>>, %arg7: memref<1x128xf32, #tpu.memory_space<vmem>>, %arg8: memref<1x128xf32, #tpu.memory_space<vmem>>, %arg9: memref<1x1xf32, #tpu.memory_space<smem>>, %arg10: memref<128x1xf32, #tpu.memory_space<vmem>>) attributes {dimension_semantics = [#tpu.dimension_semantics<parallel>], iteration_bounds = array<i64: 1>, scalar_prefetch = 0 : i64, scratch_operands = 0 : i64, tpu.core_type = #tpu.core_type<tc>, window_params = [{transform_indices = @transform_0, window_bounds = array<i64: 128, 8>}, {transform_indices = @transform_1, window_bounds = array<i64: 128, 4>}, {pipeline_mode = #tpu.pipeline_mode<synchronous>, transform_indices = @transform_2, window_bounds = array<i64: 8, 128>}, {pipeline_mode = #tpu.pipeline_mode<synchronous>, transform_indices = @transform_3, window_bounds = array<i64: 4, 128>}, {pipeline_mode = #tpu.pipeline_mode<synchronous>, transform_indices = @transform_4, window_bounds = array<i64: 1, 128>}, {pipeline_mode = #tpu.pipeline_mode<synchronous>, transform_indices = @transform_5, window_bounds = array<i64: 128, 128>}, {pipeline_mode = #tpu.pipeline_mode<synchronous>, transform_indices = @transform_6, window_bounds = array<i64: 1, 128>}, {pipeline_mode = #tpu.pipeline_mode<synchronous>, transform_indices = @transform_7, window_bounds = array<i64: 1, 128>}, {transform_indices = @transform_8, window_bounds = array<i64: 1, 1>}, {transform_indices = @transform_9, window_bounds = array<i64: 128, 1>}]} {
    %c0 = arith.constant 0 : index
    %c0_0 = arith.constant 0 : index
    %0 = vector.load %arg1[%c0, %c0_0] : memref<128x8xf32, #tpu.memory_space<vmem>>, vector<128x8xf32>
    %1 = arith.truncf %0 : vector<128x8xf32> to vector<128x8xbf16>
    %c0_1 = arith.constant 0 : index
    %c0_2 = arith.constant 0 : index
    %2 = vector.load %arg2[%c0_1, %c0_2] : memref<128x4xf32, #tpu.memory_space<vmem>>, vector<128x4xf32>
    %3 = arith.truncf %2 : vector<128x4xf32> to vector<128x4xbf16>
    %c0_3 = arith.constant 0 : index
    %c0_4 = arith.constant 0 : index
    %4 = vector.load %arg3[%c0_3, %c0_4] : memref<8x128xbf16, #tpu.memory_space<vmem>>, vector<8x128xbf16>
    %cst = arith.constant dense<0.000000e+00> : vector<128x128xf32>
    %5 = tpu.matmul %1, %4, %cst {dimension_numbers = #tpu.dot_dimension_numbers<[1], [0], [0], [1], [0, 0, 1, 1], [], []>} : vector<128x8xbf16>, vector<8x128xbf16>, vector<128x128xf32> -> vector<128x128xf32>
    %c0_5 = arith.constant 0 : index
    %c0_6 = arith.constant 0 : index
    %6 = vector.load %arg4[%c0_5, %c0_6] : memref<4x128xbf16, #tpu.memory_space<vmem>>, vector<4x128xbf16>
    %cst_7 = arith.constant dense<0.000000e+00> : vector<128x128xf32>
    %7 = tpu.matmul %3, %6, %cst_7 {dimension_numbers = #tpu.dot_dimension_numbers<[1], [0], [0], [1], [0, 0, 1, 1], [], []>} : vector<128x4xbf16>, vector<4x128xbf16>, vector<128x128xf32> -> vector<128x128xf32>
    %8 = arith.addf %5, %7 : vector<128x128xf32>
    %c0_8 = arith.constant 0 : index
    %c0_9 = arith.constant 0 : index
    %9 = vector.load %arg5[%c0_8, %c0_9] : memref<1x128xf32, #tpu.memory_space<vmem>>, vector<1x128xf32>
    %10 = vector.broadcast %9 : vector<1x128xf32> to vector<128x128xf32>
    %11 = arith.addf %8, %10 : vector<128x128xf32>
    %cst_10 = arith.constant 0.000000e+00 : f32
    %12 = vector.broadcast %cst_10 : f32 to vector<128x128xf32>
    %13 = arith.maximumf %11, %12 : vector<128x128xf32>
    %14 = arith.truncf %13 : vector<128x128xf32> to vector<128x128xbf16>
    %c0_11 = arith.constant 0 : index
    %c0_12 = arith.constant 0 : index
    %15 = vector.load %arg6[%c0_11, %c0_12] : memref<128x128xbf16, #tpu.memory_space<vmem>>, vector<128x128xbf16>
    %cst_13 = arith.constant dense<0.000000e+00> : vector<128x128xf32>
    %16 = tpu.matmul %14, %15, %cst_13 {dimension_numbers = #tpu.dot_dimension_numbers<[1], [0], [0], [1], [0, 0, 1, 1], [], []>} : vector<128x128xbf16>, vector<128x128xbf16>, vector<128x128xf32> -> vector<128x128xf32>
    %c0_14 = arith.constant 0 : index
    %c0_15 = arith.constant 0 : index
    %17 = vector.load %arg7[%c0_14, %c0_15] : memref<1x128xf32, #tpu.memory_space<vmem>>, vector<1x128xf32>
    %18 = vector.broadcast %17 : vector<1x128xf32> to vector<128x128xf32>
    %19 = arith.addf %16, %18 : vector<128x128xf32>
    %cst_16 = arith.constant 0.000000e+00 : f32
    %20 = vector.broadcast %cst_16 : f32 to vector<128x128xf32>
    %21 = arith.maximumf %19, %20 : vector<128x128xf32>
    %c0_17 = arith.constant 0 : index
    %c0_18 = arith.constant 0 : index
    %22 = vector.load %arg8[%c0_17, %c0_18] : memref<1x128xf32, #tpu.memory_space<vmem>>, vector<1x128xf32>
    %23 = vector.broadcast %22 : vector<1x128xf32> to vector<128x128xf32>
    %24 = arith.mulf %21, %23 : vector<128x128xf32>
    %cst_19 = arith.constant dense<0.000000e+00> : vector<128xf32>
    %25 = vector.multi_reduction <add>, %24, %cst_19 [1] : vector<128x128xf32> to vector<128xf32>
    %26 = vector.shape_cast %25 : vector<128xf32> to vector<128x1xf32>
    %c0_20 = arith.constant 0 : index
    %c0_21 = arith.constant 0 : index
    %27 = memref.load %arg9[%c0_20, %c0_21] : memref<1x1xf32, #tpu.memory_space<smem>>
    %28 = vector.broadcast %27 : f32 to vector<128x1xf32>
    %29 = arith.addf %26, %28 : vector<128x1xf32>
    %c0_22 = arith.constant 0 : index
    %c0_23 = arith.constant 0 : index
    %30 = vector.load %arg10[%c0_22, %c0_23] : memref<128x1xf32, #tpu.memory_space<vmem>>, vector<128x1xf32>
    tpu.vector_store %arg10[%c0_22, %c0_23], %29 {strides = array<i32>} : memref<128x1xf32, #tpu.memory_space<vmem>>, vector<128x1xf32>,
    return
  }
  func.func @transform_0(%arg0: i32) -> (i32, i32) {
    %c0_i32 = arith.constant 0 : i32
    %c0_i32_0 = arith.constant 0 : i32
    return %arg0, %c0_i32 : i32, i32
  }
  func.func @transform_1(%arg0: i32) -> (i32, i32) {
    %c0_i32 = arith.constant 0 : i32
    %c0_i32_0 = arith.constant 0 : i32
    return %arg0, %c0_i32 : i32, i32
  }
  func.func @transform_2(%arg0: i32) -> (i32, i32) {
    %c0_i32 = arith.constant 0 : i32
    %c0_i32_0 = arith.constant 0 : i32
    %c0_i32_1 = arith.constant 0 : i32
    return %c0_i32, %c0_i32_0 : i32, i32
  }
  func.func @transform_3(%arg0: i32) -> (i32, i32) {
    %c0_i32 = arith.constant 0 : i32
    %c0_i32_0 = arith.constant 0 : i32
    %c0_i32_1 = arith.constant 0 : i32
    return %c0_i32, %c0_i32_0 : i32, i32
  }
  func.func @transform_4(%arg0: i32) -> (i32, i32) {
    %c0_i32 = arith.constant 0 : i32
    %c0_i32_0 = arith.constant 0 : i32
    %c0_i32_1 = arith.constant 0 : i32
    return %c0_i32, %c0_i32_0 : i32, i32
  }
  func.func @transform_5(%arg0: i32) -> (i32, i32) {
    %c0_i32 = arith.constant 0 : i32
    %c0_i32_0 = arith.constant 0 : i32
    %c0_i32_1 = arith.constant 0 : i32
    return %c0_i32, %c0_i32_0 : i32, i32
  }
  func.func @transform_6(%arg0: i32) -> (i32, i32) {
    %c0_i32 = arith.constant 0 : i32
    %c0_i32_0 = arith.constant 0 : i32
    %c0_i32_1 = arith.constant 0 : i32
    return %c0_i32, %c0_i32_0 : i32, i32
  }
  func.func @transform_7(%arg0: i32) -> (i32, i32) {
    %c0_i32 = arith.constant 0 : i32
    %c0_i32_0 = arith.constant 0 : i32
    %c0_i32_1 = arith.constant 0 : i32
    return %c0_i32, %c0_i32_0 : i32, i32
  }
  func.func @transform_8(%arg0: i32) -> (i32, i32) {
    %c0_i32 = arith.constant 0 : i32
    %c0_i32_0 = arith.constant 0 : i32
    %c0_i32_1 = arith.constant 0 : i32
    return %c0_i32, %c0_i32_0 : i32, i32
  }
  func.func @transform_9(%arg0: i32) -> (i32, i32) {
    %c0_i32 = arith.constant 0 : i32
    %c0_i32_0 = arith.constant 0 : i32
    return %arg0, %c0_i32 : i32, i32
  }
}

</mosaic_0001>

<llo_original>
// kernel: tpu_custom_call.1
$region0: #{tpu_custom_call.1}
  #allocation0 [shape = 'u32[]', space=smem, size = 0x4, offset = 0x4, fixed_abs, tag = 'smem constant byte address 0x4 - core index']
  #allocation1 [shape = 'u32[72,128]{1,0:T(1,128)}', space=vmem, size = 0x9000, scoped, tag = 'internal scratch']
  #allocation2 [shape = 'f32[1,1]{1,0:T(1,128)S(6)}', space=smem, size = 0x200, scoped, tag = 'scoped memory for tpu_custom_call.1']
  %s0 = inlined_call_operand.vmem [shape: f32[128,8], index: 0, kind: input, shape index: {}]
  %s1 = inlined_call_operand.vmem [shape: f32[128,4], index: 1, kind: input, shape index: {}]
  %s2 = inlined_call_operand.vmem [shape: bf16[8,128], index: 2, kind: input, shape index: {}]
  %s3 = inlined_call_operand.vmem [shape: bf16[4,128], index: 3, kind: input, shape index: {}]
  %s4 = inlined_call_operand.vmem [shape: f32[1,128], index: 4, kind: input, shape index: {}]
  %s5 = inlined_call_operand.vmem [shape: bf16[128,128], index: 5, kind: input, shape index: {}]
  %s6 = inlined_call_operand.vmem [shape: f32[1,128], index: 6, kind: input, shape index: {}]
  %s7 = inlined_call_operand.vmem [shape: f32[1,128], index: 7, kind: input, shape index: {}]
  %s8 = inlined_call_operand.<no memory space> [shape: f32[1,1], index: 8, kind: input, shape index: {}]
  %s9 = inlined_call_operand.vmem [shape: f32[128,1], index: 9, kind: output, shape index: {}]
  %s10 = sld [smem:[#allocation0]]
  $region46: #{tpu_custom_call.1} parent=0
    _
  %s12 = ssub.s32 1, %s10
  %s13 = scalar_select 0, %s12, %s10
  %14 = sst [smem:[#allocation2]] %s8
  // Predicated region
  $region2: #{tpu_custom_call.1} parent=0 // pred_check
    _
  $region3: #{tpu_custom_call.1} parent=0 // pred_check_branch
    %16 = sbr.rel (0) target = $region5
  $region4: #{tpu_custom_call.1} parent=0 // pred_region
    _
  $region5: #{tpu_custom_call.1} parent=0 // pred_fallthru
    _
  // Predicated region
  $region6: #{tpu_custom_call.1} parent=0 // pred_check
    _
  $region7: #{tpu_custom_call.1} parent=0 // pred_check_branch
    %18 = sbr.rel (0) target = $region9
  $region8: #{tpu_custom_call.1} parent=0 // pred_region
    _
  $region9: #{tpu_custom_call.1} parent=0 // pred_fallthru
    _
  // Predicated region
  $region10: #{tpu_custom_call.1} parent=0 // pred_check
    _
  $region11: #{tpu_custom_call.1} parent=0 // pred_check_branch
    %20 = sbr.rel (0) target = $region13
  $region12: #{tpu_custom_call.1} parent=0 // pred_region
    _
  $region13: #{tpu_custom_call.1} parent=0 // pred_fallthru
    _
  // Predicated region
  $region14: #{tpu_custom_call.1} parent=0 // pred_check
    _
  $region15: #{tpu_custom_call.1} parent=0 // pred_check_branch
    %22 = sbr.rel (0) target = $region17
  $region16: #{tpu_custom_call.1} parent=0 // pred_region
    _
  $region17: #{tpu_custom_call.1} parent=0 // pred_fallthru
    _
  // Predicated region
  $region18: #{tpu_custom_call.1} parent=0 // pred_check
    _
  $region19: #{tpu_custom_call.1} parent=0 // pred_check_branch
    %24 = sbr.rel (0) target = $region21
  $region20: #{tpu_custom_call.1} parent=0 // pred_region
    _
  $region21: #{tpu_custom_call.1} parent=0 // pred_fallthru
    _
  // Predicated region
  $region22: #{tpu_custom_call.1} parent=0 // pred_check
    _
  $region23: #{tpu_custom_call.1} parent=0 // pred_check_branch
    %26 = sbr.rel (0) target = $region25
  $region24: #{tpu_custom_call.1} parent=0 // pred_region
    _
  $region25: #{tpu_custom_call.1} parent=0 // pred_fallthru
    _
  // Predicated region
  $region26: #{tpu_custom_call.1} parent=0 // pred_check
    _
  $region27: #{tpu_custom_call.1} parent=0 // pred_check_branch
    %28 = sbr.rel (0) target = $region29
  $region28: #{tpu_custom_call.1} parent=0 // pred_region
    _
  $region29: #{tpu_custom_call.1} parent=0 // pred_fallthru
    _
  // Predicated region
  $region30: #{tpu_custom_call.1} parent=0 // pred_check
    _
  $region31: #{tpu_custom_call.1} parent=0 // pred_check_branch
    %30 = sbr.rel (0) target = $region33
  $region32: #{tpu_custom_call.1} parent=0 // pred_region
    _
  $region33: #{tpu_custom_call.1} parent=0 // pred_fallthru
    _
  // Predicated region
  $region34: #{tpu_custom_call.1} parent=0 // pred_check
    _
  $region35: #{tpu_custom_call.1} parent=0 // pred_check_branch
    %32 = sbr.rel (0) target = $region37
  $region36: #{tpu_custom_call.1} parent=0 // pred_region
    _
  $region37: #{tpu_custom_call.1} parent=0 // pred_fallthru
    _
  %v34 = vld [vmem:[%s0] sm:$0xff]
  %v35 = vld [vmem:[%s0 + $0x8] sm:$0xff]
  %v36 = vld [vmem:[%s0 + $0x10] sm:$0xff]
  %v37 = vld [vmem:[%s0 + $0x18] sm:$0xff]
  %v38 = vld [vmem:[%s0 + $0x20] sm:$0xff]
  %v39 = vld [vmem:[%s0 + $0x28] sm:$0xff]
  %v40 = vld [vmem:[%s0 + $0x30] sm:$0xff]
  %v41 = vld [vmem:[%s0 + $0x38] sm:$0xff]
  %v42 = vld [vmem:[%s0 + $0x40] sm:$0xff]
  %v43 = vld [vmem:[%s0 + $0x48] sm:$0xff]
  %v44 = vld [vmem:[%s0 + $0x50] sm:$0xff]
  %v45 = vld [vmem:[%s0 + $0x58] sm:$0xff]
  %v46 = vld [vmem:[%s0 + $0x60] sm:$0xff]
  %v47 = vld [vmem:[%s0 + $0x68] sm:$0xff]
  %v48 = vld [vmem:[%s0 + $0x70] sm:$0xff]
  %v49 = vld [vmem:[%s0 + $0x78] sm:$0xff]
  %v50 = vpack.c.bf16 %v35, %v34
  %v51 = vpack.c.bf16 %v37, %v36
  %v52 = vpack.c.bf16 %v39, %v38
  %v53 = vpack.c.bf16 %v41, %v40
  %v54 = vpack.c.bf16 %v43, %v42
  %v55 = vpack.c.bf16 %v45, %v44
  %v56 = vpack.c.bf16 %v47, %v46
  %v57 = vpack.c.bf16 %v49, %v48
  %v58 = vld [vmem:[%s1] sm:$0xff]
  %v59 = vld [vmem:[%s1 + $0x8] sm:$0xff]
  %v60 = vld [vmem:[%s1 + $0x10] sm:$0xff]
  %v61 = vld [vmem:[%s1 + $0x18] sm:$0xff]
  %v62 = vld [vmem:[%s1 + $0x20] sm:$0xff]
  %v63 = vld [vmem:[%s1 + $0x28] sm:$0xff]
  %v64 = vld [vmem:[%s1 + $0x30] sm:$0xff]
  %v65 = vld [vmem:[%s1 + $0x38] sm:$0xff]
  %v66 = vld [vmem:[%s1 + $0x40] sm:$0xff]
  %v67 = vld [vmem:[%s1 + $0x48] sm:$0xff]
  %v68 = vld [vmem:[%s1 + $0x50] sm:$0xff]
  %v69 = vld [vmem:[%s1 + $0x58] sm:$0xff]
  %v70 = vld [vmem:[%s1 + $0x60] sm:$0xff]
  %v71 = vld [vmem:[%s1 + $0x68] sm:$0xff]
  %v72 = vld [vmem:[%s1 + $0x70] sm:$0xff]
  %v73 = vld [vmem:[%s1 + $0x78] sm:$0xff]
  %v74 = vpack.c.bf16 %v59, %v58
  %v75 = vpack.c.bf16 %v61, %v60
  %v76 = vpack.c.bf16 %v63, %v62
  %v77 = vpack.c.bf16 %v65, %v64
  %v78 = vpack.c.bf16 %v67, %v66
  %v79 = vpack.c.bf16 %v69, %v68
  %v80 = vpack.c.bf16 %v71, %v70
  %v81 = vpack.c.bf16 %v73, %v72
  %v82 = vld [vmem:[%s2] sm:$0xf]
  %v83 = vld [vmem:[%s3] sm:$0x3]
  %vm84 = vcmask 31744
  %v86 = vsel %vm84, %v74, 0
  %v89 = vsel %vm84, %v75, 0
  %v92 = vsel %vm84, %v76, 0
  %v95 = vsel %vm84, %v77, 0
  %v98 = vsel %vm84, %v78, 0
  %v101 = vsel %vm84, %v79, 0
  %v104 = vsel %vm84, %v80, 0
  %v107 = vsel %vm84, %v81, 0
  %vm109 = vcmask 1041408
  %v111 = vsel %vm109, %v83, 0
  %113 = vmatpush.bf16.msra.mxu0 0
  %114 = vmatpush.bf16.msra.mxu0 0
  %115 = vmatpush.bf16.msra.mxu0 0
  %116 = vmatpush.bf16.msra.mxu0 0
  %117 = vmatpush.bf16.msra.mxu0 0
  %118 = vmatpush.bf16.msra.mxu0 0
  %119 = vmatpush.bf16.msra.mxu0 0
  %120 = vmatpush.bf16.msra.mxu0 %v111
  %121 = vmatmul.bf16.gmra.mxu0 %v86
  %v122 = vpop.f32.mrf.mxu0
  %v123 = vadd.f32 0.0, %v122
  %v124 = vpop.f32.mrf.mxu0
  %v125 = vadd.f32 0.0, %v124
  %126 = vmatmul.bf16.gmra.mxu0 %v89
  %v127 = vpop.f32.mrf.mxu0
  %v128 = vadd.f32 0.0, %v127
  %v129 = vpop.f32.mrf.mxu0
  %v130 = vadd.f32 0.0, %v129
  %131 = vmatmul.bf16.gmra.mxu0 %v92
  %v132 = vpop.f32.mrf.mxu0
  %v133 = vadd.f32 0.0, %v132
  %v134 = vpop.f32.mrf.mxu0
  %v135 = vadd.f32 0.0, %v134
  %136 = vmatmul.bf16.gmra.mxu0 %v95
  %v137 = vpop.f32.mrf.mxu0
  %v138 = vadd.f32 0.0, %v137
  %v139 = vpop.f32.mrf.mxu0
  %v140 = vadd.f32 0.0, %v139
  %141 = vmatmul.bf16.gmra.mxu0 %v98
  %v142 = vpop.f32.mrf.mxu0
  %v143 = vadd.f32 0.0, %v142
  %v144 = vpop.f32.mrf.mxu0
  %v145 = vadd.f32 0.0, %v144
  %146 = vmatmul.bf16.gmra.mxu0 %v101
  %v147 = vpop.f32.mrf.mxu0
  %v148 = vadd.f32 0.0, %v147
  %v149 = vpop.f32.mrf.mxu0
  %v150 = vadd.f32 0.0, %v149
  %151 = vmatmul.bf16.gmra.mxu0 %v104
  %v152 = vpop.f32.mrf.mxu0
  %v153 = vadd.f32 0.0, %v152
  %v154 = vpop.f32.mrf.mxu0
  %v155 = vadd.f32 0.0, %v154
  %156 = vmatmul.bf16.gmra.mxu0 %v107
  %v157 = vpop.f32.mrf.mxu0
  %v158 = vadd.f32 0.0, %v157
  %v159 = vpop.f32.mrf.mxu0
  %v160 = vadd.f32 0.0, %v159
  %161 = vdwg.mxu0
  %vm162 = vcmask 64512
  %v164 = vsel %vm162, %v50, 0
  %v167 = vsel %vm162, %v51, 0
  %v170 = vsel %vm162, %v52, 0
  %v173 = vsel %vm162, %v53, 0
  %v176 = vsel %vm162, %v54, 0
  %v179 = vsel %vm162, %v55, 0
  %v182 = vsel %vm162, %v56, 0
  %v185 = vsel %vm162, %v57, 0
  %vm187 = vcmask 1043456
  %v189 = vsel %vm187, %v82, 0
  %191 = vmatpush.bf16.msra.mxu0 0
  %192 = vmatpush.bf16.msra.mxu0 0
  %193 = vmatpush.bf16.msra.mxu0 0
  %194 = vmatpush.bf16.msra.mxu0 0
  %195 = vmatpush.bf16.msra.mxu0 0
  %196 = vmatpush.bf16.msra.mxu0 0
  %197 = vmatpush.bf16.msra.mxu0 0
  %198 = vmatpush.bf16.msra.mxu0 %v189
  %199 = vmatmul.bf16.gmra.mxu0 %v164
  %v200 = vpop.f32.mrf.mxu0
  %v201 = vadd.f32 %v123, %v200
  %v202 = vpop.f32.mrf.mxu0
  %v203 = vadd.f32 %v125, %v202
  %204 = vmatmul.bf16.gmra.mxu0 %v167
  %v205 = vpop.f32.mrf.mxu0
  %v206 = vadd.f32 %v128, %v205
  %v207 = vpop.f32.mrf.mxu0
  %v208 = vadd.f32 %v130, %v207
  %209 = vmatmul.bf16.gmra.mxu0 %v170
  %v210 = vpop.f32.mrf.mxu0
  %v211 = vadd.f32 %v133, %v210
  %v212 = vpop.f32.mrf.mxu0
  %v213 = vadd.f32 %v135, %v212
  %214 = vmatmul.bf16.gmra.mxu0 %v173
  %v215 = vpop.f32.mrf.mxu0
  %v216 = vadd.f32 %v138, %v215
  %v217 = vpop.f32.mrf.mxu0
  %v218 = vadd.f32 %v140, %v217
  %219 = vmatmul.bf16.gmra.mxu0 %v176
  %v220 = vpop.f32.mrf.mxu0
  %v221 = vadd.f32 %v143, %v220
  %v222 = vpop.f32.mrf.mxu0
  %v223 = vadd.f32 %v145, %v222
  %224 = vmatmul.bf16.gmra.mxu0 %v179
  %v225 = vpop.f32.mrf.mxu0
  %v226 = vadd.f32 %v148, %v225
  %v227 = vpop.f32.mrf.mxu0
  %v228 = vadd.f32 %v150, %v227
  %229 = vmatmul.bf16.gmra.mxu0 %v182
  %v230 = vpop.f32.mrf.mxu0
  %v231 = vadd.f32 %v153, %v230
  %v232 = vpop.f32.mrf.mxu0
  %v233 = vadd.f32 %v155, %v232
  %234 = vmatmul.bf16.gmra.mxu0 %v185
  %v235 = vpop.f32.mrf.mxu0
  %v236 = vadd.f32 %v158, %v235
  %v237 = vpop.f32.mrf.mxu0
  %v238 = vadd.f32 %v160, %v237
  %239 = vdwg.mxu0
  %v240 = vld [vmem:[%s4] sm:$0x1]
  %v242 = vperm.slane %v240, 0
  %v244 = vadd.f32 %v201, %v242
  %v245 = vadd.f32 %v203, %v242
  %v246 = vadd.f32 %v206, %v242
  %v247 = vadd.f32 %v208, %v242
  %v248 = vadd.f32 %v211, %v242
  %v249 = vadd.f32 %v213, %v242
  %v250 = vadd.f32 %v216, %v242
  %v251 = vadd.f32 %v218, %v242
  %v252 = vadd.f32 %v221, %v242
  %v253 = vadd.f32 %v223, %v242
  %v254 = vadd.f32 %v226, %v242
  %v255 = vadd.f32 %v228, %v242
  %v256 = vadd.f32 %v231, %v242
  %v257 = vadd.f32 %v233, %v242
  %v258 = vadd.f32 %v236, %v242
  %v259 = vadd.f32 %v238, %v242
  %v260 = vmax.f32 %v244, 0.0
  %v261 = vmax.f32 %v245, 0.0
  %v262 = vmax.f32 %v246, 0.0
  %v263 = vmax.f32 %v247, 0.0
  %v264 = vmax.f32 %v248, 0.0
  %v265 = vmax.f32 %v249, 0.0
  %v266 = vmax.f32 %v250, 0.0
  %v267 = vmax.f32 %v251, 0.0
  %v268 = vmax.f32 %v252, 0.0
  %v269 = vmax.f32 %v253, 0.0
  %v270 = vmax.f32 %v254, 0.0
  %v271 = vmax.f32 %v255, 0.0
  %v272 = vmax.f32 %v256, 0.0
  %v273 = vmax.f32 %v257, 0.0
  %v274 = vmax.f32 %v258, 0.0
  %v275 = vmax.f32 %v259, 0.0
  %v276 = vpack.c.bf16 %v261, %v260
  %v277 = vpack.c.bf16 %v263, %v262
  %v278 = vpack.c.bf16 %v265, %v264
  %v279 = vpack.c.bf16 %v267, %v266
  %v280 = vpack.c.bf16 %v269, %v268
  %v281 = vpack.c.bf16 %v271, %v270
  %v282 = vpack.c.bf16 %v273, %v272
  %v283 = vpack.c.bf16 %v275, %v274
  %v284 = vld [vmem:[%s5] sm:$0xf]
  %v285 = vld [vmem:[%s5 + $0x4] sm:$0xf]
  %v286 = vld [vmem:[%s5 + $0x8] sm:$0xf]
  %v287 = vld [vmem:[%s5 + $0xc] sm:$0xf]
  %v288 = vld [vmem:[%s5 + $0x10] sm:$0xf]
  %v289 = vld [vmem:[%s5 + $0x14] sm:$0xf]
  %v290 = vld [vmem:[%s5 + $0x18] sm:$0xf]
  %v291 = vld [vmem:[%s5 + $0x1c] sm:$0xf]
  %v292 = vld [vmem:[%s5 + $0x20] sm:$0xf]
  %v293 = vld [vmem:[%s5 + $0x24] sm:$0xf]
  %v294 = vld [vmem:[%s5 + $0x28] sm:$0xf]
  %v295 = vld [vmem:[%s5 + $0x2c] sm:$0xf]
  %v296 = vld [vmem:[%s5 + $0x30] sm:$0xf]
  %v297 = vld [vmem:[%s5 + $0x34] sm:$0xf]
  %v298 = vld [vmem:[%s5 + $0x38] sm:$0xf]
  %v299 = vld [vmem:[%s5 + $0x3c] sm:$0xf]
  %v300 = vld [vmem:[%s6] sm:$0x1]
  %v302 = vperm.slane %v300, 0
  %v320 = vunpack.c.l.b16 %v284
  %v321 = vunpack.c.l.b16 %v285
  %v322 = vunpack.c.l.b16 %v286
  %v323 = vunpack.c.l.b16 %v287
  %v324 = vunpack.c.l.b16 %v288
  %v325 = vunpack.c.l.b16 %v289
  %v326 = vunpack.c.l.b16 %v290
  %v327 = vunpack.c.l.b16 %v291
  %v328 = vunpack.c.l.b16 %v292
  %v329 = vunpack.c.l.b16 %v293
  %v330 = vunpack.c.l.b16 %v294
  %v331 = vunpack.c.l.b16 %v295
  %v332 = vunpack.c.l.b16 %v296
  %v333 = vunpack.c.l.b16 %v297
  %v334 = vunpack.c.l.b16 %v298
  %v335 = vunpack.c.l.b16 %v299
  %v336 = vpack.c.b16 %v321, %v320
  %v337 = vpack.c.b16 %v323, %v322
  %v338 = vpack.c.b16 %v325, %v324
  %v339 = vpack.c.b16 %v327, %v326
  %v340 = vpack.c.b16 %v329, %v328
  %v341 = vpack.c.b16 %v331, %v330
  %v342 = vpack.c.b16 %v333, %v332
  %v343 = vpack.c.b16 %v335, %v334
  %352 = vmatpush.bf16.msra.mxu0 %v343
  %353 = vmatpush.bf16.msra.mxu0 %v342
  %354 = vmatpush.bf16.msra.mxu0 %v341
  %355 = vmatpush.bf16.msra.mxu0 %v340
  %356 = vmatpush.bf16.msra.mxu0 %v339
  %357 = vmatpush.bf16.msra.mxu0 %v338
  %358 = vmatpush.bf16.msra.mxu0 %v337
  %359 = vmatpush.bf16.msra.mxu0 %v336
  %360 = vmatmul.bf16.gmra.mxu0 %v276
  %v361 = vpop.f32.mrf.mxu0
  %v362 = vadd.f32 %v302, %v361
  %v363 = vpop.f32.mrf.mxu0
  %v364 = vadd.f32 %v302, %v363
  %365 = vmatmul.bf16.gmra.mxu0 %v277
  %v366 = vpop.f32.mrf.mxu0
  %v367 = vadd.f32 %v302, %v366
  %v368 = vpop.f32.mrf.mxu0
  %v369 = vadd.f32 %v302, %v368
  %370 = vmatmul.bf16.gmra.mxu0 %v278
  %v371 = vpop.f32.mrf.mxu0
  %v372 = vadd.f32 %v302, %v371
  %v373 = vpop.f32.mrf.mxu0
  %v374 = vadd.f32 %v302, %v373
  %375 = vmatmul.bf16.gmra.mxu0 %v279
  %v376 = vpop.f32.mrf.mxu0
  %v377 = vadd.f32 %v302, %v376
  %v378 = vpop.f32.mrf.mxu0
  %v379 = vadd.f32 %v302, %v378
  %380 = vmatmul.bf16.gmra.mxu0 %v280
  %v381 = vpop.f32.mrf.mxu0
  %v382 = vadd.f32 %v302, %v381
  %v383 = vpop.f32.mrf.mxu0
  %v384 = vadd.f32 %v302, %v383
  %385 = vmatmul.bf16.gmra.mxu0 %v281
  %v386 = vpop.f32.mrf.mxu0
  %v387 = vadd.f32 %v302, %v386
  %v388 = vpop.f32.mrf.mxu0
  %v389 = vadd.f32 %v302, %v388
  %390 = vmatmul.bf16.gmra.mxu0 %v282
  %v391 = vpop.f32.mrf.mxu0
  %v392 = vadd.f32 %v302, %v391
  %v393 = vpop.f32.mrf.mxu0
  %v394 = vadd.f32 %v302, %v393
  %395 = vmatmul.bf16.gmra.mxu0 %v283
  %v396 = vpop.f32.mrf.mxu0
  %v397 = vadd.f32 %v302, %v396
  %v398 = vpop.f32.mrf.mxu0
  %v399 = vadd.f32 %v302, %v398
  %400 = vdwg.mxu0
  %v401 = vmax.f32 %v362, 0.0
  %v402 = vmax.f32 %v364, 0.0
  %v403 = vmax.f32 %v367, 0.0
  %v404 = vmax.f32 %v369, 0.0
  %v405 = vmax.f32 %v372, 0.0
  %v406 = vmax.f32 %v374, 0.0
  %v407 = vmax.f32 %v377, 0.0
  %v408 = vmax.f32 %v379, 0.0
  %v409 = vmax.f32 %v382, 0.0
  %v410 = vmax.f32 %v384, 0.0
  %v411 = vmax.f32 %v387, 0.0
  %v412 = vmax.f32 %v389, 0.0
  %v413 = vmax.f32 %v392, 0.0
  %v414 = vmax.f32 %v394, 0.0
  %v415 = vmax.f32 %v397, 0.0
  %v416 = vmax.f32 %v399, 0.0
  %v417 = vld [vmem:[%s7] sm:$0x1]
  %v419 = vperm.slane %v417, 0
  %v421 = vmul.f32 %v401, %v419
  %v422 = vmul.f32 %v402, %v419
  %v423 = vmul.f32 %v403, %v419
  %v424 = vmul.f32 %v404, %v419
  %v425 = vmul.f32 %v405, %v419
  %v426 = vmul.f32 %v406, %v419
  %v427 = vmul.f32 %v407, %v419
  %v428 = vmul.f32 %v408, %v419
  %v429 = vmul.f32 %v409, %v419
  %v430 = vmul.f32 %v410, %v419
  %v431 = vmul.f32 %v411, %v419
  %v432 = vmul.f32 %v412, %v419
  %v433 = vmul.f32 %v413, %v419
  %v434 = vmul.f32 %v414, %v419
  %v435 = vmul.f32 %v415, %v419
  %v436 = vmul.f32 %v416, %v419
  %437 = vadd.xlane.f32.xlu0 %v421
  %v438 = vpop.xlane.xlu0 %437
  %439 = vadd.xlane.f32.xlu0 %v422
  %v440 = vpop.xlane.xlu0 %439
  %441 = vadd.xlane.f32.xlu0 %v423
  %v442 = vpop.xlane.xlu0 %441
  %443 = vadd.xlane.f32.xlu0 %v424
  %v444 = vpop.xlane.xlu0 %443
  %445 = vadd.xlane.f32.xlu0 %v425
  %v446 = vpop.xlane.xlu0 %445
  %447 = vadd.xlane.f32.xlu0 %v426
  %v448 = vpop.xlane.xlu0 %447
  %449 = vadd.xlane.f32.xlu0 %v427
  %v450 = vpop.xlane.xlu0 %449
  %451 = vadd.xlane.f32.xlu0 %v428
  %v452 = vpop.xlane.xlu0 %451
  %453 = vadd.xlane.f32.xlu0 %v429
  %v454 = vpop.xlane.xlu0 %453
  %455 = vadd.xlane.f32.xlu0 %v430
  %v456 = vpop.xlane.xlu0 %455
  %457 = vadd.xlane.f32.xlu0 %v431
  %v458 = vpop.xlane.xlu0 %457
  %459 = vadd.xlane.f32.xlu0 %v432
  %v460 = vpop.xlane.xlu0 %459
  %461 = vadd.xlane.f32.xlu0 %v433
  %v462 = vpop.xlane.xlu0 %461
  %463 = vadd.xlane.f32.xlu0 %v434
  %v464 = vpop.xlane.xlu0 %463
  %465 = vadd.xlane.f32.xlu0 %v435
  %v466 = vpop.xlane.xlu0 %465
  %467 = vadd.xlane.f32.xlu0 %v436
  %v468 = vpop.xlane.xlu0 %467
  %s469 = sld [smem:[#allocation2]]
  %v470 = vstv %s469
  %v471 = vadd.f32 %v438, %v470
  %v472 = vadd.f32 %v440, %v470
  %v473 = vadd.f32 %v442, %v470
  %v474 = vadd.f32 %v444, %v470
  %v475 = vadd.f32 %v446, %v470
  %v476 = vadd.f32 %v448, %v470
  %v477 = vadd.f32 %v450, %v470
  %v478 = vadd.f32 %v452, %v470
  %v479 = vadd.f32 %v454, %v470
  %v480 = vadd.f32 %v456, %v470
  %v481 = vadd.f32 %v458, %v470
  %v482 = vadd.f32 %v460, %v470
  %v483 = vadd.f32 %v462, %v470
  %v484 = vadd.f32 %v464, %v470
  %v485 = vadd.f32 %v466, %v470
  %v486 = vadd.f32 %v468, %v470
  %vm487 = vcmask 7168
  %488 = vst.msk [vmem:[%s9] sm:$0xff] %vm487, %v471
  %489 = vst.msk [vmem:[%s9 + $0x8] sm:$0xff] %vm487, %v472
  %490 = vst.msk [vmem:[%s9 + $0x10] sm:$0xff] %vm487, %v473
  %491 = vst.msk [vmem:[%s9 + $0x18] sm:$0xff] %vm487, %v474
  %492 = vst.msk [vmem:[%s9 + $0x20] sm:$0xff] %vm487, %v475
  %493 = vst.msk [vmem:[%s9 + $0x28] sm:$0xff] %vm487, %v476
  %494 = vst.msk [vmem:[%s9 + $0x30] sm:$0xff] %vm487, %v477
  %495 = vst.msk [vmem:[%s9 + $0x38] sm:$0xff] %vm487, %v478
  %496 = vst.msk [vmem:[%s9 + $0x40] sm:$0xff] %vm487, %v479
  %497 = vst.msk [vmem:[%s9 + $0x48] sm:$0xff] %vm487, %v480
  %498 = vst.msk [vmem:[%s9 + $0x50] sm:$0xff] %vm487, %v481
  %499 = vst.msk [vmem:[%s9 + $0x58] sm:$0xff] %vm487, %v482
  %500 = vst.msk [vmem:[%s9 + $0x60] sm:$0xff] %vm487, %v483
  %501 = vst.msk [vmem:[%s9 + $0x68] sm:$0xff] %vm487, %v484
  %502 = vst.msk [vmem:[%s9 + $0x70] sm:$0xff] %vm487, %v485
  %503 = vst.msk [vmem:[%s9 + $0x78] sm:$0xff] %vm487, %v486
  // Predicated region
  $region38: #{tpu_custom_call.1} parent=0 // pred_check
    _
  $region39: #{tpu_custom_call.1} parent=0 // pred_check_branch
    %505 = sbr.rel (0) target = $region41
  $region40: #{tpu_custom_call.1} parent=0 // pred_region
    _
  $region41: #{tpu_custom_call.1} parent=0 // pred_fallthru
    _
  // Predicated region
  $region42: #{tpu_custom_call.1} parent=0 // pred_check
    _
  $region43: #{tpu_custom_call.1} parent=0 // pred_check_branch
    %507 = sbr.rel (0) target = $region45
  $region44: #{tpu_custom_call.1} parent=0 // pred_region
    _
  $region45: #{tpu_custom_call.1} parent=0 // pred_fallthru
    _

</llo_original>
